<compile_context>
chip_gen: v5e
topology: v5e:2x2
jax: 0.10.0
libtpu: 0.0.40
codegen_flags: <defaults>
</compile_context>

<pallas_src>
import jax
import jax.numpy as jnp
from jax.experimental import pallas as pl
from jax.experimental.pallas import tpu as pltpu


# ---------------- model hyper-parameters (small, consistent with module) ----
BATCH = 2
SEQ = 8
HIDDEN = 32
HEADS = 4
HEAD_DIM = HIDDEN // HEADS
FF_DIM = 64
LN_EPS = 1e-5                      # PyTorch nn.LayerNorm default
ROWS = BATCH * SEQ                 # flattened (batch, seq) token rows

# packed weight-slab column offsets (weights stored (in, out); w2 stored transposed)
COL_Q = 0
COL_K = HIDDEN
COL_V = 2 * HIDDEN
COL_O = 3 * HIDDEN
COL_W1 = 4 * HIDDEN
COL_W2T = 4 * HIDDEN + FF_DIM
W_COLS = 4 * HIDDEN + 2 * FF_DIM   # 256 (lane-dense)


def _layer_norm(x, gamma, beta):
    # x: (ROWS, H); gamma/beta: (1, H)
    mean = jnp.mean(x, axis=-1, keepdims=True)
    var = jnp.mean((x - mean) ** 2, axis=-1, keepdims=True)
    inv = jax.lax.rsqrt(var + LN_EPS)
    return (x - mean) * inv * gamma + beta


def encoder_layer_kernel(x_ref, bias_ref, w_ref, vec_ref, out_ref):
    x = x_ref[...]                 # (ROWS, HIDDEN)
    w = w_ref[...]                 # (HIDDEN, W_COLS)
    vec = vec_ref[...]             # (3, 128)   biases + LayerNorm params
    attn_bias = bias_ref[...]      # (ROWS, ROWS)  additive 0 / -1e10

    # --- static slices of the packed bias / LayerNorm slab -------------------
    b_qkv = vec[0:1, 0:3 * HIDDEN]               # (1, 96)   [bq | bk | bv]
    b_o   = vec[0:1, 3 * HIDDEN:4 * HIDDEN]      # (1, 32)
    g1    = vec[1:2, 0 * HIDDEN:1 * HIDDEN]
    be1   = vec[1:2, 1 * HIDDEN:2 * HIDDEN]
    g2    = vec[1:2, 2 * HIDDEN:3 * HIDDEN]
    be2   = vec[1:2, 3 * HIDDEN:4 * HIDDEN]
    b_1   = vec[2:3, 0:FF_DIM]                   # (1, 64)
    b_2   = vec[2:3, FF_DIM:FF_DIM + HIDDEN]     # (1, 32)

    # --- fused Q|K|V projection: one (ROWS,H) x (H,3H) MXU call --------------
    qkv = jnp.dot(x, w[:, COL_Q:COL_O],
                  preferred_element_type=jnp.float32) + b_qkv      # (ROWS, 96)

    # head-major stacking: (HEADS, ROWS, HEAD_DIM) via leading-dim stack only
    def split_heads(col0):
        return jnp.stack(
            [qkv[:, col0 + h * HEAD_DIM: col0 + (h + 1) * HEAD_DIM]
             for h in range(HEADS)], axis=0)

    qh = split_heads(0)
    kh = split_heads(HIDDEN)
    vh = split_heads(2 * HIDDEN)

    # --- multi-head attention, batched over heads, all B*S rows at once ------
    inv_scale = jnp.float32(HEAD_DIM ** -0.5)
    energy = jnp.einsum("hqd,hkd->hqk", qh, kh,
                        preferred_element_type=jnp.float32)        # (HEADS, ROWS, ROWS)
    # scale + (block-diagonal batch mask | key mask) as additive bias
    energy = energy * inv_scale + attn_bias[None, :, :]
    e_max = jnp.max(energy, axis=-1, keepdims=True)
    p = jnp.exp(energy - e_max)
    denom = jnp.sum(p, axis=-1, keepdims=True)
    p = p * pl.reciprocal(denom, approx=True)                      # EUP, not VPU divide
    # dropout(attention) is identity in eval mode
    ctx_h = jnp.einsum("hqk,hkd->hqd", p, vh,
                       preferred_element_type=jnp.float32)         # (HEADS, ROWS, HEAD_DIM)
    ctx = jnp.concatenate([ctx_h[h] for h in range(HEADS)], axis=-1)  # (ROWS, HIDDEN)

    attn_out = jnp.dot(ctx, w[:, COL_O:COL_W1],
                       preferred_element_type=jnp.float32) + b_o

    # residual + LayerNorm (dropout = identity)
    src1 = _layer_norm(x + attn_out, g1, be1)

    # --- position-wise feed-forward -------------------------------------------
    hid = jnp.dot(src1, w[:, COL_W1:COL_W2T],
                  preferred_element_type=jnp.float32) + b_1
    hid = jnp.maximum(hid, 0.0)                                    # relu
    # second FFN matmul against the transposed-stored weight (contract last dims)
    ffn = jax.lax.dot_general(hid, w[:, COL_W2T:W_COLS],
                              (((1,), (1,)), ((), ())),
                              preferred_element_type=jnp.float32) + b_2

    out_ref[...] = _layer_norm(src1 + ffn, g2, be2)


def encoder_layer(src, src_mask, params):
    """src: (B, S, H) f32; src_mask: (B, 1, 1, S) f32 (0 => masked)."""
    B, S, H = src.shape
    (wq, bq, wk, bk, wv, bv, wo, bo, w1, b1, w2, b2, g1, be1, g2, be2) = params

    # --- pack all 16 parameters into two lane-dense slabs ---------------------
    w_slab = jnp.concatenate([wq, wk, wv, wo, w1, w2.T], axis=1)              # (32, 256)
    vec_slab = jnp.concatenate([
        jnp.concatenate([bq, bk, bv, bo], axis=1),                            # (1, 128)
        jnp.concatenate([g1, be1, g2, be2], axis=1),                          # (1, 128)
        jnp.concatenate([b1, b2, jnp.zeros((1, H), jnp.float32)], axis=1),    # (1, 128)
    ], axis=0)                                                                # (3, 128)

    # --- flatten (batch, seq) into one row axis; per-batch attention is kept
    #     by a block-diagonal additive bias (0 for same-batch & unmasked keys,
    #     -1e10 otherwise), matching the module's masked_fill(-1e10). ---------
    x2d = src.reshape(B * S, H)
    key_ok = src_mask.reshape(B, S) != 0                                      # (B, S)
    same_batch = jnp.eye(B, dtype=bool)
    valid = same_batch[:, None, :, None] & key_ok[None, None, :, :]           # (B,1,B,S)
    valid = jnp.broadcast_to(valid, (B, S, B, S)).reshape(B * S, B * S)
    attn_bias = jnp.where(valid, 0.0, -1e10).astype(jnp.float32)              # (B*S, B*S)

    out2d = pl.pallas_call(
        encoder_layer_kernel,
        out_shape=jax.ShapeDtypeStruct((B * S, H), jnp.float32),
        in_specs=[pl.BlockSpec(memory_space=pltpu.MemorySpace.VMEM)] * 4,
        out_specs=pl.BlockSpec(memory_space=pltpu.MemorySpace.VMEM),
    )(x2d, attn_bias, w_slab, vec_slab)
    return out2d.reshape(B, S, H)


# ---------------------- pure-JAX reference (for verification) ---------------
def encoder_layer_ref(src, src_mask, params):
    (wq, bq, wk, bk, wv, bv, wo, bo, w1, b1, w2, b2, g1, be1, g2, be2) = params
    B, S, H = src.shape

    q = src @ wq + bq
    k = src @ wk + bk
    v = src @ wv + bv
    q = q.reshape(B, S, HEADS, HEAD_DIM).transpose(0, 2, 1, 3)
    k = k.reshape(B, S, HEADS, HEAD_DIM).transpose(0, 2, 1, 3)
    v = v.reshape(B, S, HEADS, HEAD_DIM).transpose(0, 2, 1, 3)
    energy = jnp.einsum("bhqd,bhkd->bhqk", q, k) / jnp.sqrt(jnp.float32(HEAD_DIM))
    energy = jnp.where(src_mask == 0, -1e10, energy)
    attn = jax.nn.softmax(energy, axis=-1)
    ctx = jnp.einsum("bhqk,bhkd->bhqd", attn, v)
    ctx = ctx.transpose(0, 2, 1, 3).reshape(B, S, H)
    attn_out = ctx @ wo + bo

    def ln(x, g, b):
        m = x.mean(-1, keepdims=True)
        var = ((x - m) ** 2).mean(-1, keepdims=True)
        return (x - m) / jnp.sqrt(var + LN_EPS) * g + b

    s1 = ln(src + attn_out, g1, be1)
    ffn = jnp.maximum(s1 @ w1 + b1, 0.0) @ w2 + b2
    return ln(s1 + ffn, g2, be2)


def make_params(key):
    """Deterministic init. Linear weights stored as (in, out); biases/LN as (1, dim)."""
    ks = jax.random.split(key, 16)
    n = lambda k, shp, s: jax.random.normal(k, shp, jnp.float32) * s
    wq = n(ks[0], (HIDDEN, HIDDEN), 0.05)
    wk = n(ks[1], (HIDDEN, HIDDEN), 0.05)
    wv = n(ks[2], (HIDDEN, HIDDEN), 0.05)
    wo = n(ks[3], (HIDDEN, HIDDEN), 0.05)
    w1 = n(ks[4], (HIDDEN, FF_DIM), 0.05)
    w2 = n(ks[5], (FF_DIM, HIDDEN), 0.05)
    bq = n(ks[6], (1, HIDDEN), 0.02)
    bk = n(ks[7], (1, HIDDEN), 0.02)
    bv = n(ks[8], (1, HIDDEN), 0.02)
    bo = n(ks[9], (1, HIDDEN), 0.02)
    b1 = n(ks[10], (1, FF_DIM), 0.02)
    b2 = n(ks[11], (1, HIDDEN), 0.02)
    g1 = 1.0 + n(ks[12], (1, HIDDEN), 0.1)
    be1 = n(ks[13], (1, HIDDEN), 0.05)
    g2 = 1.0 + n(ks[14], (1, HIDDEN), 0.1)
    be2 = n(ks[15], (1, HIDDEN), 0.05)
    return (wq, bq, wk, bk, wv, bv, wo, bo, w1, b1, w2, b2, g1, be1, g2, be2)


if __name__ == "__main__":
    key = jax.random.PRNGKey(0)
    k_src, k_par = jax.random.split(key)

    src = jax.random.normal(k_src, (BATCH, SEQ, HIDDEN), jnp.float32)
    # mask: [batch, 1, 1, src_len]; mask out the last 2 positions of batch 1
    src_mask = jnp.ones((BATCH, 1, 1, SEQ), jnp.float32)
    src_mask = src_mask.at[1, 0, 0, SEQ - 2:].set(0.0)

    params = make_params(k_par)

    out = encoder_layer(src, src_mask, params)
    out = jax.block_until_ready(out)

    ref = encoder_layer_ref(src, src_mask, params)
    assert out.shape == (BATCH, SEQ, HIDDEN)
    # tolerance slightly relaxed for pl.reciprocal(approx=True) in the softmax
    assert jnp.allclose(out, ref, atol=2e-3, rtol=2e-3), "mismatch vs JAX reference"

    print("KERNEL_OK")
</pallas_src>

<mosaic_0001>
module attributes {stable_mosaic.version = 11 : i64} {
  func.func @encoder_layer_kernel(%arg0: memref<16x32xf32, #tpu.memory_space<vmem>>, %arg1: memref<16x16xf32, #tpu.memory_space<vmem>>, %arg2: memref<32x256xf32, #tpu.memory_space<vmem>>, %arg3: memref<3x128xf32, #tpu.memory_space<vmem>>, %arg4: memref<16x32xf32, #tpu.memory_space<vmem>>) attributes {dimension_semantics = [], scalar_prefetch = 0 : i64, scratch_operands = 0 : i64, tpu.core_type = #tpu.core_type<tc>} {
    %c0 = arith.constant 0 : index
    %c0_0 = arith.constant 0 : index
    %0 = vector.load %arg0[%c0, %c0_0] : memref<16x32xf32, #tpu.memory_space<vmem>>, vector<16x32xf32>
    %c0_1 = arith.constant 0 : index
    %c0_2 = arith.constant 0 : index
    %1 = vector.load %arg2[%c0_1, %c0_2] : memref<32x256xf32, #tpu.memory_space<vmem>>, vector<32x256xf32>
    %c0_3 = arith.constant 0 : index
    %c0_4 = arith.constant 0 : index
    %2 = vector.load %arg3[%c0_3, %c0_4] : memref<3x128xf32, #tpu.memory_space<vmem>>, vector<3x128xf32>
    %c0_5 = arith.constant 0 : index
    %c0_6 = arith.constant 0 : index
    %3 = vector.load %arg1[%c0_5, %c0_6] : memref<16x16xf32, #tpu.memory_space<vmem>>, vector<16x16xf32>
    %4 = vector.extract_strided_slice %2 {offsets = [0, 0], sizes = [1, 96], strides = [1, 1]} : vector<3x128xf32> to vector<1x96xf32>
    %5 = vector.extract_strided_slice %2 {offsets = [0, 96], sizes = [1, 32], strides = [1, 1]} : vector<3x128xf32> to vector<1x32xf32>
    %6 = vector.extract_strided_slice %2 {offsets = [1, 0], sizes = [1, 32], strides = [1, 1]} : vector<3x128xf32> to vector<1x32xf32>
    %7 = vector.extract_strided_slice %2 {offsets = [1, 32], sizes = [1, 32], strides = [1, 1]} : vector<3x128xf32> to vector<1x32xf32>
    %8 = vector.extract_strided_slice %2 {offsets = [1, 64], sizes = [1, 32], strides = [1, 1]} : vector<3x128xf32> to vector<1x32xf32>
    %9 = vector.extract_strided_slice %2 {offsets = [1, 96], sizes = [1, 32], strides = [1, 1]} : vector<3x128xf32> to vector<1x32xf32>
    %10 = vector.extract_strided_slice %2 {offsets = [2, 0], sizes = [1, 64], strides = [1, 1]} : vector<3x128xf32> to vector<1x64xf32>
    %11 = vector.extract_strided_slice %2 {offsets = [2, 64], sizes = [1, 32], strides = [1, 1]} : vector<3x128xf32> to vector<1x32xf32>
    %12 = vector.extract_strided_slice %1 {offsets = [0, 0], sizes = [32, 96], strides = [1, 1]} : vector<32x256xf32> to vector<32x96xf32>
    %cst = arith.constant dense<0.000000e+00> : vector<16x96xf32>
    %13 = tpu.matmul %0, %12, %cst {dimension_numbers = #tpu.dot_dimension_numbers<[1], [0], [0], [1], [0, 0, 1, 1], [], []>} : vector<16x32xf32>, vector<32x96xf32>, vector<16x96xf32> -> vector<16x96xf32>
    %14 = vector.broadcast %4 : vector<1x96xf32> to vector<16x96xf32>
    %15 = arith.addf %13, %14 : vector<16x96xf32>
    %16 = vector.extract_strided_slice %15 {offsets = [0, 0], sizes = [16, 8], strides = [1, 1]} : vector<16x96xf32> to vector<16x8xf32>
    %17 = vector.extract_strided_slice %15 {offsets = [0, 8], sizes = [16, 8], strides = [1, 1]} : vector<16x96xf32> to vector<16x8xf32>
    %18 = vector.extract_strided_slice %15 {offsets = [0, 16], sizes = [16, 8], strides = [1, 1]} : vector<16x96xf32> to vector<16x8xf32>
    %19 = vector.extract_strided_slice %15 {offsets = [0, 24], sizes = [16, 8], strides = [1, 1]} : vector<16x96xf32> to vector<16x8xf32>
    %20 = vector.shape_cast %16 : vector<16x8xf32> to vector<1x16x8xf32>
    %21 = vector.shape_cast %17 : vector<16x8xf32> to vector<1x16x8xf32>
    %22 = vector.shape_cast %18 : vector<16x8xf32> to vector<1x16x8xf32>
    %23 = vector.shape_cast %19 : vector<16x8xf32> to vector<1x16x8xf32>
    %24 = tpu.concatenate %20, %21, %22, %23 in 0 : vector<1x16x8xf32>, vector<1x16x8xf32>, vector<1x16x8xf32>, vector<1x16x8xf32> -> vector<4x16x8xf32>
    %25 = vector.extract_strided_slice %15 {offsets = [0, 32], sizes = [16, 8], strides = [1, 1]} : vector<16x96xf32> to vector<16x8xf32>
    %26 = vector.extract_strided_slice %15 {offsets = [0, 40], sizes = [16, 8], strides = [1, 1]} : vector<16x96xf32> to vector<16x8xf32>
    %27 = vector.extract_strided_slice %15 {offsets = [0, 48], sizes = [16, 8], strides = [1, 1]} : vector<16x96xf32> to vector<16x8xf32>
    %28 = vector.extract_strided_slice %15 {offsets = [0, 56], sizes = [16, 8], strides = [1, 1]} : vector<16x96xf32> to vector<16x8xf32>
    %29 = vector.shape_cast %25 : vector<16x8xf32> to vector<1x16x8xf32>
    %30 = vector.shape_cast %26 : vector<16x8xf32> to vector<1x16x8xf32>
    %31 = vector.shape_cast %27 : vector<16x8xf32> to vector<1x16x8xf32>
    %32 = vector.shape_cast %28 : vector<16x8xf32> to vector<1x16x8xf32>
    %33 = tpu.concatenate %29, %30, %31, %32 in 0 : vector<1x16x8xf32>, vector<1x16x8xf32>, vector<1x16x8xf32>, vector<1x16x8xf32> -> vector<4x16x8xf32>
    %34 = vector.extract_strided_slice %15 {offsets = [0, 64], sizes = [16, 8], strides = [1, 1]} : vector<16x96xf32> to vector<16x8xf32>
    %35 = vector.extract_strided_slice %15 {offsets = [0, 72], sizes = [16, 8], strides = [1, 1]} : vector<16x96xf32> to vector<16x8xf32>
    %36 = vector.extract_strided_slice %15 {offsets = [0, 80], sizes = [16, 8], strides = [1, 1]} : vector<16x96xf32> to vector<16x8xf32>
    %37 = vector.extract_strided_slice %15 {offsets = [0, 88], sizes = [16, 8], strides = [1, 1]} : vector<16x96xf32> to vector<16x8xf32>
    %38 = vector.shape_cast %34 : vector<16x8xf32> to vector<1x16x8xf32>
    %39 = vector.shape_cast %35 : vector<16x8xf32> to vector<1x16x8xf32>
    %40 = vector.shape_cast %36 : vector<16x8xf32> to vector<1x16x8xf32>
    %41 = vector.shape_cast %37 : vector<16x8xf32> to vector<1x16x8xf32>
    %42 = tpu.concatenate %38, %39, %40, %41 in 0 : vector<1x16x8xf32>, vector<1x16x8xf32>, vector<1x16x8xf32>, vector<1x16x8xf32> -> vector<4x16x8xf32>
    "tpu.trace_start"() <{level = 10 : i32, message = "hqd,hkd->hqk"}> : () -> ()
    %cst_7 = arith.constant dense<0.000000e+00> : vector<4x16x16xf32>
    %43 = tpu.matmul %24, %33, %cst_7 {dimension_numbers = #tpu.dot_dimension_numbers<[2], [2], [1], [1], [0, 0, 0, 1, 1, 1], [0], [0]>} : vector<4x16x8xf32>, vector<4x16x8xf32>, vector<4x16x16xf32> -> vector<4x16x16xf32>
    "tpu.trace_stop"() : () -> ()
    %cst_8 = arith.constant 0.353553385 : f32
    %44 = vector.broadcast %cst_8 : f32 to vector<4x16x16xf32>
    %45 = arith.mulf %43, %44 : vector<4x16x16xf32>
    %46 = vector.shape_cast %3 : vector<16x16xf32> to vector<1x16x16xf32>
    %47 = vector.broadcast %46 : vector<1x16x16xf32> to vector<4x16x16xf32>
    %48 = arith.addf %45, %47 : vector<4x16x16xf32>
    %cst_9 = arith.constant dense<0xFF800000> : vector<4x16xf32>
    %49 = vector.multi_reduction <maximumf>, %48, %cst_9 [2] : vector<4x16x16xf32> to vector<4x16xf32>
    %50 = vector.shape_cast %49 : vector<4x16xf32> to vector<4x16x1xf32>
    %51 = vector.broadcast %50 : vector<4x16x1xf32> to vector<4x16x16xf32>
    %52 = arith.subf %48, %51 : vector<4x16x16xf32>
    %53 = math.exp %52 : vector<4x16x16xf32>
    %cst_10 = arith.constant dense<0.000000e+00> : vector<4x16xf32>
    %54 = vector.multi_reduction <add>, %53, %cst_10 [2] : vector<4x16x16xf32> to vector<4x16xf32>
    %55 = vector.shape_cast %54 : vector<4x16xf32> to vector<4x16x1xf32>
    %56 = tpu.reciprocal %55 {approx = true} : vector<4x16x1xf32> -> vector<4x16x1xf32>
    %57 = vector.broadcast %56 : vector<4x16x1xf32> to vector<4x16x16xf32>
    %58 = arith.mulf %53, %57 : vector<4x16x16xf32>
    "tpu.trace_start"() <{level = 10 : i32, message = "hqk,hkd->hqd"}> : () -> ()
    %cst_11 = arith.constant dense<0.000000e+00> : vector<4x16x8xf32>
    %59 = tpu.matmul %58, %42, %cst_11 {dimension_numbers = #tpu.dot_dimension_numbers<[2], [1], [1], [2], [0, 0, 0, 1, 1, 2], [0], [0]>} : vector<4x16x16xf32>, vector<4x16x8xf32>, vector<4x16x8xf32> -> vector<4x16x8xf32>
    "tpu.trace_stop"() : () -> ()
    %60 = vector.extract_strided_slice %59 {offsets = [0, 0, 0], sizes = [1, 16, 8], strides = [1, 1, 1]} : vector<4x16x8xf32> to vector<1x16x8xf32>
    %61 = vector.shape_cast %60 : vector<1x16x8xf32> to vector<16x8xf32>
    %62 = vector.extract_strided_slice %59 {offsets = [1, 0, 0], sizes = [1, 16, 8], strides = [1, 1, 1]} : vector<4x16x8xf32> to vector<1x16x8xf32>
    %63 = vector.shape_cast %62 : vector<1x16x8xf32> to vector<16x8xf32>
    %64 = vector.extract_strided_slice %59 {offsets = [2, 0, 0], sizes = [1, 16, 8], strides = [1, 1, 1]} : vector<4x16x8xf32> to vector<1x16x8xf32>
    %65 = vector.shape_cast %64 : vector<1x16x8xf32> to vector<16x8xf32>
    %66 = vector.extract_strided_slice %59 {offsets = [3, 0, 0], sizes = [1, 16, 8], strides = [1, 1, 1]} : vector<4x16x8xf32> to vector<1x16x8xf32>
    %67 = vector.shape_cast %66 : vector<1x16x8xf32> to vector<16x8xf32>
    %68 = tpu.concatenate %61, %63, %65, %67 in 1 : vector<16x8xf32>, vector<16x8xf32>, vector<16x8xf32>, vector<16x8xf32> -> vector<16x32xf32>
    %69 = vector.extract_strided_slice %1 {offsets = [0, 96], sizes = [32, 32], strides = [1, 1]} : vector<32x256xf32> to vector<32x32xf32>
    %cst_12 = arith.constant dense<0.000000e+00> : vector<16x32xf32>
    %70 = tpu.matmul %68, %69, %cst_12 {dimension_numbers = #tpu.dot_dimension_numbers<[1], [0], [0], [1], [0, 0, 1, 1], [], []>} : vector<16x32xf32>, vector<32x32xf32>, vector<16x32xf32> -> vector<16x32xf32>
    %71 = vector.broadcast %5 : vector<1x32xf32> to vector<16x32xf32>
    %72 = arith.addf %70, %71 : vector<16x32xf32>
    %73 = arith.addf %0, %72 : vector<16x32xf32>
    %cst_13 = arith.constant dense<0.000000e+00> : vector<16xf32>
    %74 = vector.multi_reduction <add>, %73, %cst_13 [1] : vector<16x32xf32> to vector<16xf32>
    %75 = vector.shape_cast %74 : vector<16xf32> to vector<16x1xf32>
    %cst_14 = arith.constant 3.200000e+01 : f32
    %76 = vector.broadcast %cst_14 : f32 to vector<16x1xf32>
    %77 = arith.divf %75, %76 : vector<16x1xf32>
    %78 = vector.broadcast %77 : vector<16x1xf32> to vector<16x32xf32>
    %79 = arith.subf %73, %78 : vector<16x32xf32>
    %80 = arith.mulf %79, %79 : vector<16x32xf32>
    %cst_15 = arith.constant dense<0.000000e+00> : vector<16xf32>
    %81 = vector.multi_reduction <add>, %80, %cst_15 [1] : vector<16x32xf32> to vector<16xf32>
    %82 = vector.shape_cast %81 : vector<16xf32> to vector<16x1xf32>
    %cst_16 = arith.constant 3.200000e+01 : f32
    %83 = vector.broadcast %cst_16 : f32 to vector<16x1xf32>
    %84 = arith.divf %82, %83 : vector<16x1xf32>
    %cst_17 = arith.constant 9.99999974E-6 : f32
    %85 = vector.broadcast %cst_17 : f32 to vector<16x1xf32>
    %86 = arith.addf %84, %85 : vector<16x1xf32>
    %87 = math.rsqrt %86 : vector<16x1xf32>
    %88 = vector.broadcast %77 : vector<16x1xf32> to vector<16x32xf32>
    %89 = arith.subf %73, %88 : vector<16x32xf32>
    %90 = vector.broadcast %87 : vector<16x1xf32> to vector<16x32xf32>
    %91 = arith.mulf %89, %90 : vector<16x32xf32>
    %92 = vector.broadcast %6 : vector<1x32xf32> to vector<16x32xf32>
    %93 = arith.mulf %91, %92 : vector<16x32xf32>
    %94 = vector.broadcast %7 : vector<1x32xf32> to vector<16x32xf32>
    %95 = arith.addf %93, %94 : vector<16x32xf32>
    %96 = vector.extract_strided_slice %1 {offsets = [0, 128], sizes = [32, 64], strides = [1, 1]} : vector<32x256xf32> to vector<32x64xf32>
    %cst_18 = arith.constant dense<0.000000e+00> : vector<16x64xf32>
    %97 = tpu.matmul %95, %96, %cst_18 {dimension_numbers = #tpu.dot_dimension_numbers<[1], [0], [0], [1], [0, 0, 1, 1], [], []>} : vector<16x32xf32>, vector<32x64xf32>, vector<16x64xf32> -> vector<16x64xf32>
    %98 = vector.broadcast %10 : vector<1x64xf32> to vector<16x64xf32>
    %99 = arith.addf %97, %98 : vector<16x64xf32>
    %cst_19 = arith.constant 0.000000e+00 : f32
    %100 = vector.broadcast %cst_19 : f32 to vector<16x64xf32>
    %101 = arith.maximumf %99, %100 : vector<16x64xf32>
    %102 = vector.extract_strided_slice %1 {offsets = [0, 192], sizes = [32, 64], strides = [1, 1]} : vector<32x256xf32> to vector<32x64xf32>
    %cst_20 = arith.constant dense<0.000000e+00> : vector<16x32xf32>
    %103 = tpu.matmul %101, %102, %cst_20 {dimension_numbers = #tpu.dot_dimension_numbers<[1], [1], [0], [0], [0, 0, 1, 0], [], []>} : vector<16x64xf32>, vector<32x64xf32>, vector<16x32xf32> -> vector<16x32xf32>
    %104 = vector.broadcast %11 : vector<1x32xf32> to vector<16x32xf32>
    %105 = arith.addf %103, %104 : vector<16x32xf32>
    %106 = arith.addf %95, %105 : vector<16x32xf32>
    %cst_21 = arith.constant dense<0.000000e+00> : vector<16xf32>
    %107 = vector.multi_reduction <add>, %106, %cst_21 [1] : vector<16x32xf32> to vector<16xf32>
    %108 = vector.shape_cast %107 : vector<16xf32> to vector<16x1xf32>
    %cst_22 = arith.constant 3.200000e+01 : f32
    %109 = vector.broadcast %cst_22 : f32 to vector<16x1xf32>
    %110 = arith.divf %108, %109 : vector<16x1xf32>
    %111 = vector.broadcast %110 : vector<16x1xf32> to vector<16x32xf32>
    %112 = arith.subf %106, %111 : vector<16x32xf32>
    %113 = arith.mulf %112, %112 : vector<16x32xf32>
    %cst_23 = arith.constant dense<0.000000e+00> : vector<16xf32>
    %114 = vector.multi_reduction <add>, %113, %cst_23 [1] : vector<16x32xf32> to vector<16xf32>
    %115 = vector.shape_cast %114 : vector<16xf32> to vector<16x1xf32>
    %cst_24 = arith.constant 3.200000e+01 : f32
    %116 = vector.broadcast %cst_24 : f32 to vector<16x1xf32>
    %117 = arith.divf %115, %116 : vector<16x1xf32>
    %cst_25 = arith.constant 9.99999974E-6 : f32
    %118 = vector.broadcast %cst_25 : f32 to vector<16x1xf32>
    %119 = arith.addf %117, %118 : vector<16x1xf32>
    %120 = math.rsqrt %119 : vector<16x1xf32>
    %121 = vector.broadcast %110 : vector<16x1xf32> to vector<16x32xf32>
    %122 = arith.subf %106, %121 : vector<16x32xf32>
    %123 = vector.broadcast %120 : vector<16x1xf32> to vector<16x32xf32>
    %124 = arith.mulf %122, %123 : vector<16x32xf32>
    %125 = vector.broadcast %8 : vector<1x32xf32> to vector<16x32xf32>
    %126 = arith.mulf %124, %125 : vector<16x32xf32>
    %127 = vector.broadcast %9 : vector<1x32xf32> to vector<16x32xf32>
    %128 = arith.addf %126, %127 : vector<16x32xf32>
    %c0_26 = arith.constant 0 : index
    %c0_27 = arith.constant 0 : index
    %129 = vector.load %arg4[%c0_26, %c0_27] : memref<16x32xf32, #tpu.memory_space<vmem>>, vector<16x32xf32>
    tpu.vector_store %arg4[%c0_26, %c0_27], %128 {strides = array<i32>} : memref<16x32xf32, #tpu.memory_space<vmem>>, vector<16x32xf32>,
    return
  }
}

</mosaic_0001>

<llo_original>
// kernel: tpu_custom_call.1
$region0: #{tpu_custom_call.1}
  #allocation0 [shape = 'u32[]', space=smem, size = 0x4, offset = 0x4, fixed_abs, tag = 'smem constant byte address 0x4 - core index']
  #allocation1 [shape = 'u32[72,128]{1,0:T(1,128)}', space=vmem, size = 0x9000, scoped, tag = 'internal scratch']
  %s0 = inlined_call_operand.hbm [shape: f32[16,32], index: 0, kind: input, shape index: {}]
  %s1 = inlined_call_operand.hbm [shape: f32[16,16], index: 1, kind: input, shape index: {}]
  %s2 = inlined_call_operand.hbm [shape: f32[32,256], index: 2, kind: input, shape index: {}]
  %s3 = inlined_call_operand.hbm [shape: f32[3,128], index: 3, kind: input, shape index: {}]
  %s4 = inlined_call_operand.hbm [shape: f32[16,32], index: 4, kind: output, shape index: {}]
  %s5 = sld [smem:[#allocation0]]
  $region42: #{tpu_custom_call.1} parent=0
    _
  %s7 = ssub.s32 1, %s5
  %s8 = scalar_select 0, %s7, %s5
  $region1: #{tpu_custom_call.1} parent=0
    #allocation2 [shape = 'u8[8192]{0}', space=vmem, size = 0x2000, scoped, tag = 'input window, operand 0, single buffered']
    #allocation3 [shape = 's32[1]{0}', space=sflag, size = 0x4, scoped, tag = 'scoped memory for tpu_custom_call.1']
    #allocation4 [shape = 's32[1]{0}', space=sflag, size = 0x4, scoped, tag = 'scoped memory for tpu_custom_call.1']
    #allocation5 [shape = 'u8[8192]{0}', space=vmem, size = 0x2000, scoped, tag = 'input window, operand 1, single buffered']
    #allocation6 [shape = 's32[1]{0}', space=sflag, size = 0x4, scoped, tag = 'scoped memory for tpu_custom_call.1']
    #allocation7 [shape = 'u8[32768]{0}', space=vmem, size = 0x8000, scoped, tag = 'input window, operand 2, single buffered']
    #allocation8 [shape = 'u8[2048]{0}', space=vmem, size = 0x800, scoped, tag = 'input window, operand 3, single buffered']
    #allocation9 [shape = 's32[1]{0}', space=sflag, size = 0x4, scoped, tag = 'scoped memory for tpu_custom_call.1']
    #allocation10 [shape = 'u8[8192]{0}', space=vmem, size = 0x2000, scoped, tag = 'output window, operand 0, single buffered']
    %9 = vsyncpa [#allocation3], 0
    %10 = vsyncpa [#allocation6], 0
    %11 = vsyncpa [#allocation9], 0
    %12 = vsyncpa [#allocation4], 0
    // Predicated region
    $region2: #{tpu_custom_call.1} parent=1 // pred_check
      _
    $region3: #{tpu_custom_call.1} parent=1 // pred_check_branch
      %14 = sbr.rel (0) target = $region5
    $region4: #{tpu_custom_call.1} parent=1 // pred_region
      %16 = vsyncadd [#allocation3], 0
      %s17 = sshll.u32 %s0, 4
      %s18 = int_to_ptr.hbm [resolvable:$true] %s17
      %s19 = sshll.u32 [#allocation2], 4
      %s20 = int_to_ptr.vmem [resolvable:$true] %s19
      %25 = dma.hbm_to_vmem [thread:$0]  %s18, 256, %s20, [#allocation3], 128, 128, 8
    $region5: #{tpu_custom_call.1} parent=1 // pred_fallthru
      _
    // Predicated region
    $region6: #{tpu_custom_call.1} parent=1 // pred_check
      _
    $region7: #{tpu_custom_call.1} parent=1 // pred_check_branch
      %27 = sbr.rel (0) target = $region9
    $region8: #{tpu_custom_call.1} parent=1 // pred_region
      %29 = vsyncadd [#allocation6], 0
      %s30 = sshll.u32 %s1, 4
      %s31 = int_to_ptr.hbm [resolvable:$true] %s30
      %s32 = sshll.u32 [#allocation5], 4
      %s33 = int_to_ptr.vmem [resolvable:$true] %s32
      %38 = dma.hbm_to_vmem [thread:$0]  %s31, 256, %s33, [#allocation6], 128, 128, 8
    $region9: #{tpu_custom_call.1} parent=1 // pred_fallthru
      _
    // Predicated region
    $region10: #{tpu_custom_call.1} parent=1 // pred_check
      _
    $region11: #{tpu_custom_call.1} parent=1 // pred_check_branch
      %40 = sbr.rel (0) target = $region13
    $region12: #{tpu_custom_call.1} parent=1 // pred_region
      %42 = vsyncadd [#allocation6], 0
      %s43 = sshll.u32 %s2, 4
      %s44 = int_to_ptr.hbm [resolvable:$true] %s43
      %s45 = sshll.u32 [#allocation7], 4
      %s46 = int_to_ptr.vmem [resolvable:$true] %s45
      %51 = dma.hbm_to_vmem [thread:$0]  %s44, 1024, %s46, [#allocation6], 256, 256, 16
    $region13: #{tpu_custom_call.1} parent=1 // pred_fallthru
      _
    // Predicated region
    $region14: #{tpu_custom_call.1} parent=1 // pred_check
      _
    $region15: #{tpu_custom_call.1} parent=1 // pred_check_branch
      %53 = sbr.rel (0) target = $region17
    $region16: #{tpu_custom_call.1} parent=1 // pred_region
      %55 = vsyncadd [#allocation9], 0
      %s57 = sshll.u32 %s3, 4
      %s58 = int_to_ptr.hbm [resolvable:$true] %s57
      %s59 = sshll.u32 [#allocation8], 4
      %s60 = int_to_ptr.vmem [resolvable:$true] %s59
      %62 = dma.hbm_to_vmem [thread:$0]  %s58, 64, %s60, [#allocation9]
    $region17: #{tpu_custom_call.1} parent=1 // pred_fallthru
      _
    // Predicated region
    $region18: #{tpu_custom_call.1} parent=1 // pred_check
      _
    $region19: #{tpu_custom_call.1} parent=1 // pred_check_branch
      %64 = sbr.rel (0) target = $region21
    $region20: #{tpu_custom_call.1} parent=1 // pred_region
      %66 = dma.done [#allocation3], 256
    $region21: #{tpu_custom_call.1} parent=1 // pred_fallthru
      _
    // Predicated region
    $region22: #{tpu_custom_call.1} parent=1 // pred_check
      _
    $region23: #{tpu_custom_call.1} parent=1 // pred_check_branch
      %68 = sbr.rel (0) target = $region25
    $region24: #{tpu_custom_call.1} parent=1 // pred_region
      %70 = dma.done [#allocation6], 256
    $region25: #{tpu_custom_call.1} parent=1 // pred_fallthru
      _
    // Predicated region
    $region26: #{tpu_custom_call.1} parent=1 // pred_check
      _
    $region27: #{tpu_custom_call.1} parent=1 // pred_check_branch
      %72 = sbr.rel (0) target = $region29
    $region28: #{tpu_custom_call.1} parent=1 // pred_region
      %74 = dma.done [#allocation6], 1024
    $region29: #{tpu_custom_call.1} parent=1 // pred_fallthru
      _
    // Predicated region
    $region30: #{tpu_custom_call.1} parent=1 // pred_check
      _
    $region31: #{tpu_custom_call.1} parent=1 // pred_check_branch
      %76 = sbr.rel (0) target = $region33
    $region32: #{tpu_custom_call.1} parent=1 // pred_region
      %78 = dma.done [#allocation9], 64
    $region33: #{tpu_custom_call.1} parent=1 // pred_fallthru
      _
    %v79 = vld [vmem:[#allocation2] sm:$0xff]
    %v80 = vld [vmem:[#allocation2 + $0x8] sm:$0xff]
    %v81 = vld [vmem:[#allocation7] sm:$0xff]
    %v82 = vld [vmem:[#allocation7 + $0x8] sm:$0xff]
    %v83 = vld [vmem:[#allocation7 + $0x10] sm:$0xff]
    %v84 = vld [vmem:[#allocation7 + $0x18] sm:$0xff]
    %v85 = vld [vmem:[#allocation7 + $0x20] sm:$0xff]
    %v86 = vld [vmem:[#allocation7 + $0x28] sm:$0xff]
    %v87 = vld [vmem:[#allocation7 + $0x30] sm:$0xff]
    %v88 = vld [vmem:[#allocation7 + $0x38] sm:$0xff]
    %v89 = vld [vmem:[#allocation8] sm:$0x7]
    %v90 = vld [vmem:[#allocation5] sm:$0xff]
    %v91 = vld [vmem:[#allocation5 + $0x8] sm:$0xff]
    %v92 = vperm.slane %v89, 0
    %vm93 = vcmask 261120
    %v95 = vsel %vm93, %v79, 0
    %v98 = vsel %vm93, %v80, 0
    %100 = vmatpush.msra.mxu0 0.0
    %101 = vmatpush.msra.mxu0 0.0
    %102 = vmatpush.msra.mxu0 0.0
    %103 = vmatpush.msra.mxu0 0.0
    %104 = vmatpush.msra.mxu0 0.0
    %105 = vmatpush.msra.mxu0 0.0
    %106 = vmatpush.msra.mxu0 0.0
    %107 = vmatpush.msra.mxu0 0.0
    %108 = vmatpush.msra.mxu0 0.0
    %109 = vmatpush.msra.mxu0 0.0
    %110 = vmatpush.msra.mxu0 0.0
    %111 = vmatpush.msra.mxu0 0.0
    %112 = vmatpush.msra.mxu0 %v87
    %113 = vmatpush.msra.mxu0 %v85
    %114 = vmatpush.msra.mxu0 %v83
    %115 = vmatpush.msra.mxu0 %v81
    %116 = vmatmul.f32.gmra.mxu0 %v95
    %v117 = vpop.f32.mrf.mxu0
    %v118 = vadd.f32 %v92, %v117
    %119 = vmatmul.f32.gmra.mxu0 %v98
    %v120 = vpop.f32.mrf.mxu0
    %v121 = vadd.f32 %v92, %v120
    %122 = vdwg.mxu0
    %125 = vrot.lane.b32.xlu0 %v118, 120
    %v126 = vpop.permute.xlu0 %125
    %127 = vrot.lane.b32.xlu0 %v121, 120
    %v128 = vpop.permute.xlu0 %127
    %129 = vrot.lane.b32.xlu0 %v118, 112
    %v130 = vpop.permute.xlu0 %129
    %131 = vrot.lane.b32.xlu0 %v121, 112
    %v132 = vpop.permute.xlu0 %131
    %133 = vrot.lane.b32.xlu0 %v118, 104
    %v134 = vpop.permute.xlu0 %133
    %135 = vrot.lane.b32.xlu0 %v121, 104
    %v136 = vpop.permute.xlu0 %135
    %137 = vrot.lane.b32.xlu0 %v118, 96
    %v138 = vpop.permute.xlu0 %137
    %139 = vrot.lane.b32.xlu0 %v121, 96
    %v140 = vpop.permute.xlu0 %139
    %vm141 = vcmask 64512
    %v142 = vsel %vm141, %v118, 0
    %v144 = vsel %vm141, %v121, 0
    %v146 = vsel %vm141, %v138, 0
    %v148 = vsel %vm141, %v140, 0
    %150 = vmatpush.xpose.msra.mxu0 0.0
    %151 = vmatpush.xpose.msra.mxu0 0.0
    %152 = vmatpush.xpose.msra.mxu0 0.0
    %153 = vmatpush.xpose.msra.mxu0 0.0
    %154 = vmatpush.xpose.msra.mxu0 0.0
    %155 = vmatpush.xpose.msra.mxu0 0.0
    %156 = vmatpush.xpose.msra.mxu0 0.0
    %157 = vmatpush.xpose.msra.mxu0 0.0
    %158 = vmatpush.xpose.msra.mxu0 0.0
    %159 = vmatpush.xpose.msra.mxu0 0.0
    %160 = vmatpush.xpose.msra.mxu0 0.0
    %161 = vmatpush.xpose.msra.mxu0 0.0
    %162 = vmatpush.xpose.msra.mxu0 0.0
    %163 = vmatpush.xpose.msra.mxu0 0.0
    %164 = vmatpush.xpose.msra.mxu0 %v148
    %165 = vmatpush.xpose.msra.mxu0 %v146
    %166 = vmatmul.f32.gmra.mxu0 %v142
    %v167 = vpop.f32.mrf.mxu0
    %v168 = vadd.f32 0.0, %v167
    %169 = vmatmul.f32.gmra.mxu0 %v144
    %v170 = vpop.f32.mrf.mxu0
    %v171 = vadd.f32 0.0, %v170
    %172 = vdwg.mxu0
    %173 = vrot.lane.b32.xlu0 %v126, 96
    %v174 = vpop.permute.xlu0 %173
    %175 = vrot.lane.b32.xlu0 %v128, 96
    %v176 = vpop.permute.xlu0 %175
    %v177 = vsel %vm141, %v126, 0
    %v179 = vsel %vm141, %v128, 0
    %v181 = vsel %vm141, %v174, 0
    %v183 = vsel %vm141, %v176, 0
    %185 = vmatpush.xpose.msra.mxu0 0.0
    %186 = vmatpush.xpose.msra.mxu0 0.0
    %187 = vmatpush.xpose.msra.mxu0 0.0
    %188 = vmatpush.xpose.msra.mxu0 0.0
    %189 = vmatpush.xpose.msra.mxu0 0.0
    %190 = vmatpush.xpose.msra.mxu0 0.0
    %191 = vmatpush.xpose.msra.mxu0 0.0
    %192 = vmatpush.xpose.msra.mxu0 0.0
    %193 = vmatpush.xpose.msra.mxu0 0.0
    %194 = vmatpush.xpose.msra.mxu0 0.0
    %195 = vmatpush.xpose.msra.mxu0 0.0
    %196 = vmatpush.xpose.msra.mxu0 0.0
    %197 = vmatpush.xpose.msra.mxu0 0.0
    %198 = vmatpush.xpose.msra.mxu0 0.0
    %199 = vmatpush.xpose.msra.mxu0 %v183
    %200 = vmatpush.xpose.msra.mxu0 %v181
    %201 = vmatmul.f32.gmra.mxu0 %v177
    %v202 = vpop.f32.mrf.mxu0
    %v203 = vadd.f32 0.0, %v202
    %204 = vmatmul.f32.gmra.mxu0 %v179
    %v205 = vpop.f32.mrf.mxu0
    %v206 = vadd.f32 0.0, %v205
    %207 = vdwg.mxu0
    %208 = vrot.lane.b32.xlu0 %v130, 96
    %v209 = vpop.permute.xlu0 %208
    %210 = vrot.lane.b32.xlu0 %v132, 96
    %v211 = vpop.permute.xlu0 %210
    %v212 = vsel %vm141, %v130, 0
    %v214 = vsel %vm141, %v132, 0
    %v216 = vsel %vm141, %v209, 0
    %v218 = vsel %vm141, %v211, 0
    %220 = vmatpush.xpose.msra.mxu0 0.0
    %221 = vmatpush.xpose.msra.mxu0 0.0
    %222 = vmatpush.xpose.msra.mxu0 0.0
    %223 = vmatpush.xpose.msra.mxu0 0.0
    %224 = vmatpush.xpose.msra.mxu0 0.0
    %225 = vmatpush.xpose.msra.mxu0 0.0
    %226 = vmatpush.xpose.msra.mxu0 0.0
    %227 = vmatpush.xpose.msra.mxu0 0.0
    %228 = vmatpush.xpose.msra.mxu0 0.0
    %229 = vmatpush.xpose.msra.mxu0 0.0
    %230 = vmatpush.xpose.msra.mxu0 0.0
    %231 = vmatpush.xpose.msra.mxu0 0.0
    %232 = vmatpush.xpose.msra.mxu0 0.0
    %233 = vmatpush.xpose.msra.mxu0 0.0
    %234 = vmatpush.xpose.msra.mxu0 %v218
    %235 = vmatpush.xpose.msra.mxu0 %v216
    %236 = vmatmul.f32.gmra.mxu0 %v212
    %v237 = vpop.f32.mrf.mxu0
    %v238 = vadd.f32 0.0, %v237
    %239 = vmatmul.f32.gmra.mxu0 %v214
    %v240 = vpop.f32.mrf.mxu0
    %v241 = vadd.f32 0.0, %v240
    %242 = vdwg.mxu0
    %243 = vrot.lane.b32.xlu0 %v134, 96
    %v244 = vpop.permute.xlu0 %243
    %245 = vrot.lane.b32.xlu0 %v136, 96
    %v246 = vpop.permute.xlu0 %245
    %v247 = vsel %vm141, %v134, 0
    %v249 = vsel %vm141, %v136, 0
    %v251 = vsel %vm141, %v244, 0
    %v253 = vsel %vm141, %v246, 0
    %255 = vmatpush.xpose.msra.mxu0 0.0
    %256 = vmatpush.xpose.msra.mxu0 0.0
    %257 = vmatpush.xpose.msra.mxu0 0.0
    %258 = vmatpush.xpose.msra.mxu0 0.0
    %259 = vmatpush.xpose.msra.mxu0 0.0
    %260 = vmatpush.xpose.msra.mxu0 0.0
    %261 = vmatpush.xpose.msra.mxu0 0.0
    %262 = vmatpush.xpose.msra.mxu0 0.0
    %263 = vmatpush.xpose.msra.mxu0 0.0
    %264 = vmatpush.xpose.msra.mxu0 0.0
    %265 = vmatpush.xpose.msra.mxu0 0.0
    %266 = vmatpush.xpose.msra.mxu0 0.0
    %267 = vmatpush.xpose.msra.mxu0 0.0
    %268 = vmatpush.xpose.msra.mxu0 0.0
    %269 = vmatpush.xpose.msra.mxu0 %v253
    %270 = vmatpush.xpose.msra.mxu0 %v251
    %271 = vmatmul.f32.gmra.mxu0 %v247
    %v272 = vpop.f32.mrf.mxu0
    %v273 = vadd.f32 0.0, %v272
    %274 = vmatmul.f32.gmra.mxu0 %v249
    %v275 = vpop.f32.mrf.mxu0
    %v276 = vadd.f32 0.0, %v275
    %277 = vdwg.mxu0
    %v278 = vmul.f32 %v168, 0.35355338
    %v279 = vmul.f32 %v171, 0.35355338
    %v280 = vmul.f32 %v203, 0.35355338
    %v281 = vmul.f32 %v206, 0.35355338
    %v282 = vmul.f32 %v238, 0.35355338
    %v283 = vmul.f32 %v241, 0.35355338
    %v284 = vmul.f32 %v273, 0.35355338
    %v285 = vmul.f32 %v276, 0.35355338
    %v286 = vadd.f32 %v278, %v90
    %v287 = vadd.f32 %v279, %v91
    %v288 = vadd.f32 %v280, %v90
    %v289 = vadd.f32 %v281, %v91
    %v290 = vadd.f32 %v282, %v90
    %v291 = vadd.f32 %v283, %v91
    %v292 = vadd.f32 %v284, %v90
    %v293 = vadd.f32 %v285, %v91
    %vm294 = vcmask 130048
    %v295 = vsel %vm294, %v286, -inf
    %296 = vmax.xlane.f32.xlu0 %v295
    %v297 = vpop.xlane.xlu0 %296
    %v298 = vsel %vm294, %v287, -inf
    %299 = vmax.xlane.f32.xlu0 %v298
    %v300 = vpop.xlane.xlu0 %299
    %v301 = vsel %vm294, %v288, -inf
    %302 = vmax.xlane.f32.xlu0 %v301
    %v303 = vpop.xlane.xlu0 %302
    %v304 = vsel %vm294, %v289, -inf
    %305 = vmax.xlane.f32.xlu0 %v304
    %v306 = vpop.xlane.xlu0 %305
    %v307 = vsel %vm294, %v290, -inf
    %308 = vmax.xlane.f32.xlu0 %v307
    %v309 = vpop.xlane.xlu0 %308
    %v310 = vsel %vm294, %v291, -inf
    %311 = vmax.xlane.f32.xlu0 %v310
    %v312 = vpop.xlane.xlu0 %311
    %v313 = vsel %vm294, %v292, -inf
    %314 = vmax.xlane.f32.xlu0 %v313
    %v315 = vpop.xlane.xlu0 %314
    %v316 = vsel %vm294, %v293, -inf
    %317 = vmax.xlane.f32.xlu0 %v316
    %v318 = vpop.xlane.xlu0 %317
    %v319 = vsub.f32 %v286, %v297
    %v320 = vsub.f32 %v287, %v300
    %v321 = vsub.f32 %v288, %v303
    %v322 = vsub.f32 %v289, %v306
    %v323 = vsub.f32 %v290, %v309
    %v324 = vsub.f32 %v291, %v312
    %v325 = vsub.f32 %v292, %v315
    %v326 = vsub.f32 %v293, %v318
    %v327 = vmul.f32 %v319, 1.442695
    %v328 = vpow.pop %v327
    %v329 = vmul.f32 %v320, 1.442695
    %v330 = vpow.pop %v329
    %v331 = vmul.f32 %v321, 1.442695
    %v332 = vpow.pop %v331
    %v333 = vmul.f32 %v322, 1.442695
    %v334 = vpow.pop %v333
    %v335 = vmul.f32 %v323, 1.442695
    %v336 = vpow.pop %v335
    %v337 = vmul.f32 %v324, 1.442695
    %v338 = vpow.pop %v337
    %v339 = vmul.f32 %v325, 1.442695
    %v340 = vpow.pop %v339
    %v341 = vmul.f32 %v326, 1.442695
    %v342 = vpow.pop %v341
    %v343 = vsel %vm294, %v328, 0.0
    %344 = vadd.xlane.f32.xlu0 %v343
    %v345 = vpop.xlane.xlu0 %344
    %v346 = vsel %vm294, %v330, 0.0
    %347 = vadd.xlane.f32.xlu0 %v346
    %v348 = vpop.xlane.xlu0 %347
    %v349 = vsel %vm294, %v332, 0.0
    %350 = vadd.xlane.f32.xlu0 %v349
    %v351 = vpop.xlane.xlu0 %350
    %v352 = vsel %vm294, %v334, 0.0
    %353 = vadd.xlane.f32.xlu0 %v352
    %v354 = vpop.xlane.xlu0 %353
    %v355 = vsel %vm294, %v336, 0.0
    %356 = vadd.xlane.f32.xlu0 %v355
    %v357 = vpop.xlane.xlu0 %356
    %v358 = vsel %vm294, %v338, 0.0
    %359 = vadd.xlane.f32.xlu0 %v358
    %v360 = vpop.xlane.xlu0 %359
    %v361 = vsel %vm294, %v340, 0.0
    %362 = vadd.xlane.f32.xlu0 %v361
    %v363 = vpop.xlane.xlu0 %362
    %v364 = vsel %vm294, %v342, 0.0
    %365 = vadd.xlane.f32.xlu0 %v364
    %v366 = vpop.xlane.xlu0 %365
    %v367 = vrcp.pop %v345
    %v368 = vrcp.pop %v348
    %v369 = vrcp.pop %v351
    %v370 = vrcp.pop %v354
    %v371 = vrcp.pop %v357
    %v372 = vrcp.pop %v360
    %v373 = vrcp.pop %v363
    %v374 = vrcp.pop %v366
    %v375 = vmul.f32 %v328, %v367
    %v376 = vmul.f32 %v330, %v368
    %v377 = vmul.f32 %v332, %v369
    %v378 = vmul.f32 %v334, %v370
    %v379 = vmul.f32 %v336, %v371
    %v380 = vmul.f32 %v338, %v372
    %v381 = vmul.f32 %v340, %v373
    %v382 = vmul.f32 %v342, %v374
    %383 = vrot.lane.b32.xlu0 %v118, 64
    %v384 = vpop.permute.xlu0 %383
    %385 = vrot.lane.b32.xlu0 %v121, 64
    %v386 = vpop.permute.xlu0 %385
    %v390 = vsel %vm294, %v375, 0
    %v393 = vsel %vm294, %v376, 0
    %395 = vmatpush.msra.mxu0 0.0
    %396 = vmatpush.msra.mxu0 0.0
    %397 = vmatpush.msra.mxu0 0.0
    %398 = vmatpush.msra.mxu0 0.0
    %399 = vmatpush.msra.mxu0 0.0
    %400 = vmatpush.msra.mxu0 0.0
    %401 = vmatpush.msra.mxu0 0.0
    %402 = vmatpush.msra.mxu0 0.0
    %403 = vmatpush.msra.mxu0 0.0
    %404 = vmatpush.msra.mxu0 0.0
    %405 = vmatpush.msra.mxu0 0.0
    %406 = vmatpush.msra.mxu0 0.0
    %407 = vmatpush.msra.mxu0 0.0
    %408 = vmatpush.msra.mxu0 0.0
    %409 = vmatpush.msra.mxu0 %v386
    %410 = vmatpush.msra.mxu0 %v384
    %411 = vmatmul.f32.gmra.mxu0 %v390
    %v412 = vpop.f32.mrf.mxu0
    %v413 = vadd.f32 0.0, %v412
    %414 = vmatmul.f32.gmra.mxu0 %v393
    %v415 = vpop.f32.mrf.mxu0
    %v416 = vadd.f32 0.0, %v415
    %417 = vdwg.mxu0
    %418 = vrot.lane.b32.xlu0 %v126, 64
    %v419 = vpop.permute.xlu0 %418
    %420 = vrot.lane.b32.xlu0 %v128, 64
    %v421 = vpop.permute.xlu0 %420
    %v425 = vsel %vm294, %v377, 0
    %v428 = vsel %vm294, %v378, 0
    %430 = vmatpush.msra.mxu0 0.0
    %431 = vmatpush.msra.mxu0 0.0
    %432 = vmatpush.msra.mxu0 0.0
    %433 = vmatpush.msra.mxu0 0.0
    %434 = vmatpush.msra.mxu0 0.0
    %435 = vmatpush.msra.mxu0 0.0
    %436 = vmatpush.msra.mxu0 0.0
    %437 = vmatpush.msra.mxu0 0.0
    %438 = vmatpush.msra.mxu0 0.0
    %439 = vmatpush.msra.mxu0 0.0
    %440 = vmatpush.msra.mxu0 0.0
    %441 = vmatpush.msra.mxu0 0.0
    %442 = vmatpush.msra.mxu0 0.0
    %443 = vmatpush.msra.mxu0 0.0
    %444 = vmatpush.msra.mxu0 %v421
    %445 = vmatpush.msra.mxu0 %v419
    %446 = vmatmul.f32.gmra.mxu0 %v425
    %v447 = vpop.f32.mrf.mxu0
    %v448 = vadd.f32 0.0, %v447
    %449 = vmatmul.f32.gmra.mxu0 %v428
    %v450 = vpop.f32.mrf.mxu0
    %v451 = vadd.f32 0.0, %v450
    %452 = vdwg.mxu0
    %453 = vrot.lane.b32.xlu0 %v130, 64
    %v454 = vpop.permute.xlu0 %453
    %455 = vrot.lane.b32.xlu0 %v132, 64
    %v456 = vpop.permute.xlu0 %455
    %v460 = vsel %vm294, %v379, 0
    %v463 = vsel %vm294, %v380, 0
    %465 = vmatpush.msra.mxu0 0.0
    %466 = vmatpush.msra.mxu0 0.0
    %467 = vmatpush.msra.mxu0 0.0
    %468 = vmatpush.msra.mxu0 0.0
    %469 = vmatpush.msra.mxu0 0.0
    %470 = vmatpush.msra.mxu0 0.0
    %471 = vmatpush.msra.mxu0 0.0
    %472 = vmatpush.msra.mxu0 0.0
    %473 = vmatpush.msra.mxu0 0.0
    %474 = vmatpush.msra.mxu0 0.0
    %475 = vmatpush.msra.mxu0 0.0
    %476 = vmatpush.msra.mxu0 0.0
    %477 = vmatpush.msra.mxu0 0.0
    %478 = vmatpush.msra.mxu0 0.0
    %479 = vmatpush.msra.mxu0 %v456
    %480 = vmatpush.msra.mxu0 %v454
    %481 = vmatmul.f32.gmra.mxu0 %v460
    %v482 = vpop.f32.mrf.mxu0
    %v483 = vadd.f32 0.0, %v482
    %484 = vmatmul.f32.gmra.mxu0 %v463
    %v485 = vpop.f32.mrf.mxu0
    %v486 = vadd.f32 0.0, %v485
    %487 = vdwg.mxu0
    %488 = vrot.lane.b32.xlu0 %v134, 64
    %v489 = vpop.permute.xlu0 %488
    %490 = vrot.lane.b32.xlu0 %v136, 64
    %v491 = vpop.permute.xlu0 %490
    %v495 = vsel %vm294, %v381, 0
    %v498 = vsel %vm294, %v382, 0
    %500 = vmatpush.msra.mxu0 0.0
    %501 = vmatpush.msra.mxu0 0.0
    %502 = vmatpush.msra.mxu0 0.0
    %503 = vmatpush.msra.mxu0 0.0
    %504 = vmatpush.msra.mxu0 0.0
    %505 = vmatpush.msra.mxu0 0.0
    %506 = vmatpush.msra.mxu0 0.0
    %507 = vmatpush.msra.mxu0 0.0
    %508 = vmatpush.msra.mxu0 0.0
    %509 = vmatpush.msra.mxu0 0.0
    %510 = vmatpush.msra.mxu0 0.0
    %511 = vmatpush.msra.mxu0 0.0
    %512 = vmatpush.msra.mxu0 0.0
    %513 = vmatpush.msra.mxu0 0.0
    %514 = vmatpush.msra.mxu0 %v491
    %515 = vmatpush.msra.mxu0 %v489
    %516 = vmatmul.f32.gmra.mxu0 %v495
    %v517 = vpop.f32.mrf.mxu0
    %v518 = vadd.f32 0.0, %v517
    %519 = vmatmul.f32.gmra.mxu0 %v498
    %v520 = vpop.f32.mrf.mxu0
    %v521 = vadd.f32 0.0, %v520
    %522 = vdwg.mxu0
    %525 = vrot.lane.b32.xlu0 %v448, 8
    %v526 = vpop.permute.xlu0 %525
    %527 = vrot.lane.b32.xlu0 %v451, 8
    %v528 = vpop.permute.xlu0 %527
    %533 = vrot.lane.b32.xlu0 %v483, 16
    %v534 = vpop.permute.xlu0 %533
    %535 = vrot.lane.b32.xlu0 %v486, 16
    %v536 = vpop.permute.xlu0 %535
    %541 = vrot.lane.b32.xlu0 %v518, 24
    %v542 = vpop.permute.xlu0 %541
    %543 = vrot.lane.b32.xlu0 %v521, 24
    %v544 = vpop.permute.xlu0 %543
    %v547 = vsel %vm141, %v413, %v526
    %v548 = vsel %vm141, %v416, %v528
    %v549 = vsel %vm294, %v547, %v534
    %v550 = vsel %vm294, %v548, %v536
    %vm551 = vcmask 195584
    %v552 = vsel %vm551, %v549, %v542
    %v553 = vsel %vm551, %v550, %v544
    %558 = vrot.lane.b32.xlu0 %v81, 32
    %v559 = vpop.permute.xlu0 %558
    %560 = vrot.lane.b32.xlu0 %v83, 32
    %v561 = vpop.permute.xlu0 %560
    %562 = vrot.lane.b32.xlu0 %v85, 32
    %v563 = vpop.permute.xlu0 %562
    %564 = vrot.lane.b32.xlu0 %v87, 32
    %v565 = vpop.permute.xlu0 %564
    %571 = vrot.lane.b32.xlu0 %v92, 32
    %v572 = vpop.permute.xlu0 %571
    %v575 = vsel %vm93, %v552, 0
    %v578 = vsel %vm93, %v553, 0
    %580 = vmatpush.msra.mxu0 0.0
    %581 = vmatpush.msra.mxu0 0.0
    %582 = vmatpush.msra.mxu0 0.0
    %583 = vmatpush.msra.mxu0 0.0
    %584 = vmatpush.msra.mxu0 0.0
    %585 = vmatpush.msra.mxu0 0.0
    %586 = vmatpush.msra.mxu0 0.0
    %587 = vmatpush.msra.mxu0 0.0
    %588 = vmatpush.msra.mxu0 0.0
    %589 = vmatpush.msra.mxu0 0.0
    %590 = vmatpush.msra.mxu0 0.0
    %591 = vmatpush.msra.mxu0 0.0
    %592 = vmatpush.msra.mxu0 %v565
    %593 = vmatpush.msra.mxu0 %v563
    %594 = vmatpush.msra.mxu0 %v561
    %595 = vmatpush.msra.mxu0 %v559
    %596 = vmatmul.f32.gmra.mxu0 %v575
    %v597 = vpop.f32.mrf.mxu0
    %v598 = vadd.f32 %v572, %v597
    %599 = vmatmul.f32.gmra.mxu0 %v578
    %v600 = vpop.f32.mrf.mxu0
    %v601 = vadd.f32 %v572, %v600
    %602 = vdwg.mxu0
    %v603 = vadd.f32 %v79, %v598
    %v604 = vadd.f32 %v80, %v601
    %v605 = vsel %vm93, %v603, 0.0
    %606 = vadd.xlane.f32.xlu0 %v605
    %v607 = vpop.xlane.xlu0 %606
    %v608 = vsel %vm93, %v604, 0.0
    %609 = vadd.xlane.f32.xlu0 %v608
    %v610 = vpop.xlane.xlu0 %609
    %v611 = vrcp.pop 32.0
    %v612 = vmul.f32 32.0, %v611
    %v613 = vsub.f32 1.0, %v612
    %v614 = vmul.f32 %v611, %v613
    %v615 = vadd.f32 %v611, %v614
    %vm616 = vweird.f32 %v611
    %v617 = vsel %vm616, %v611, %v615
    %v618 = vmul.f32 %v607, %v617
    %v619 = vmul.f32 %v610, %v617
    %v620 = vsub.f32 %v603, %v618
    %v621 = vsub.f32 %v604, %v619
    %v622 = vmul.f32 %v620, %v620
    %v623 = vmul.f32 %v621, %v621
    %v624 = vsel %vm93, %v622, 0.0
    %625 = vadd.xlane.f32.xlu0 %v624
    %v626 = vpop.xlane.xlu0 %625
    %v627 = vsel %vm93, %v623, 0.0
    %628 = vadd.xlane.f32.xlu0 %v627
    %v629 = vpop.xlane.xlu0 %628
    %v630 = vmul.f32 %v626, %v617
    %v631 = vmul.f32 %v629, %v617
    %v632 = vadd.f32 %v630, 1e-05
    %v633 = vadd.f32 %v631, 1e-05
    %v634 = vrsqrt.pop %v632
    %v635 = vmul.f32 %v634, %v632
    %v636 = vmul.f32 %v635, %v634
    %v637 = vmul.f32 0.5, %v636
    %v638 = vsub.f32 1.5, %v637
    %v639 = vmul.f32 %v634, %v638
    %vm640 = vweird.f32 %v632
    %vm641 = vweird.f32 %v634
    %vm642 = vmor %vm640, %vm641
    %v643 = vsel %vm642, %v634, %v639
    %v644 = vrsqrt.pop %v633
    %v645 = vmul.f32 %v644, %v633
    %v646 = vmul.f32 %v645, %v644
    %v647 = vmul.f32 0.5, %v646
    %v648 = vsub.f32 1.5, %v647
    %v649 = vmul.f32 %v644, %v648
    %vm650 = vweird.f32 %v633
    %vm651 = vweird.f32 %v644
    %vm652 = vmor %vm650, %vm651
    %v653 = vsel %vm652, %v644, %v649
    %v654 = vmul.f32 %v620, %v643
    %v655 = vmul.f32 %v621, %v653
    %v656 = vperm.slane %v89, 1
    %v657 = vmul.f32 %v654, %v656
    %v658 = vmul.f32 %v655, %v656
    %660 = vrot.lane.b32.xlu0 %v656, 96
    %v661 = vpop.permute.xlu0 %660
    %v663 = vadd.f32 %v657, %v661
    %v664 = vadd.f32 %v658, %v661
    %v665 = vperm.slane %v89, 2
    %v667 = vsel %vm93, %v663, 0
    %v670 = vsel %vm93, %v664, 0
    %672 = vmatpush.msra.mxu0 0.0
    %673 = vmatpush.msra.mxu0 0.0
    %674 = vmatpush.msra.mxu0 0.0
    %675 = vmatpush.msra.mxu0 0.0
    %676 = vmatpush.msra.mxu0 0.0
    %677 = vmatpush.msra.mxu0 0.0
    %678 = vmatpush.msra.mxu0 0.0
    %679 = vmatpush.msra.mxu0 0.0
    %680 = vmatpush.msra.mxu0 0.0
    %681 = vmatpush.msra.mxu0 0.0
    %682 = vmatpush.msra.mxu0 0.0
    %683 = vmatpush.msra.mxu0 0.0
    %684 = vmatpush.msra.mxu0 %v88
    %685 = vmatpush.msra.mxu0 %v86
    %686 = vmatpush.msra.mxu0 %v84
    %687 = vmatpush.msra.mxu0 %v82
    %688 = vmatmul.f32.gmra.mxu0 %v667
    %v689 = vpop.f32.mrf.mxu0
    %v690 = vadd.f32 %v665, %v689
    %691 = vmatmul.f32.gmra.mxu0 %v670
    %v692 = vpop.f32.mrf.mxu0
    %v693 = vadd.f32 %v665, %v692
    %694 = vdwg.mxu0
    %v695 = vmax.f32 %v690, 0.0
    %v696 = vmax.f32 %v693, 0.0
    %701 = vrot.lane.b32.xlu0 %v82, 64
    %v702 = vpop.permute.xlu0 %701
    %703 = vrot.lane.b32.xlu0 %v84, 64
    %v704 = vpop.permute.xlu0 %703
    %705 = vrot.lane.b32.xlu0 %v86, 64
    %v706 = vpop.permute.xlu0 %705
    %707 = vrot.lane.b32.xlu0 %v88, 64
    %v708 = vpop.permute.xlu0 %707
    %710 = vrot.lane.b32.xlu0 %v665, 64
    %v711 = vpop.permute.xlu0 %710
    %vm713 = vcmask 523264
    %v715 = vsel %vm713, %v695, 0
    %v718 = vsel %vm713, %v696, 0
    %v720 = vsel %vm713, %v702, 0
    %v722 = vsel %vm713, %v704, 0
    %v724 = vsel %vm713, %v706, 0
    %v726 = vsel %vm713, %v708, 0
    %728 = vmatpush.xpose.msra.mxu0 0.0
    %729 = vmatpush.xpose.msra.mxu0 0.0
    %730 = vmatpush.xpose.msra.mxu0 0.0
    %731 = vmatpush.xpose.msra.mxu0 0.0
    %732 = vmatpush.xpose.msra.mxu0 0.0
    %733 = vmatpush.xpose.msra.mxu0 0.0
    %734 = vmatpush.xpose.msra.mxu0 0.0
    %735 = vmatpush.xpose.msra.mxu0 0.0
    %736 = vmatpush.xpose.msra.mxu0 0.0
    %737 = vmatpush.xpose.msra.mxu0 0.0
    %738 = vmatpush.xpose.msra.mxu0 0.0
    %739 = vmatpush.xpose.msra.mxu0 0.0
    %740 = vmatpush.xpose.msra.mxu0 %v726
    %741 = vmatpush.xpose.msra.mxu0 %v724
    %742 = vmatpush.xpose.msra.mxu0 %v722
    %743 = vmatpush.xpose.msra.mxu0 %v720
    %744 = vmatmul.f32.gmra.mxu0 %v715
    %v745 = vpop.f32.mrf.mxu0
    %v746 = vadd.f32 %v711, %v745
    %747 = vmatmul.f32.gmra.mxu0 %v718
    %v748 = vpop.f32.mrf.mxu0
    %v749 = vadd.f32 %v711, %v748
    %750 = vdwg.mxu0
    %v751 = vadd.f32 %v663, %v746
    %v752 = vadd.f32 %v664, %v749
    %v753 = vsel %vm93, %v751, 0.0
    %754 = vadd.xlane.f32.xlu0 %v753
    %v755 = vpop.xlane.xlu0 %754
    %v756 = vsel %vm93, %v752, 0.0
    %757 = vadd.xlane.f32.xlu0 %v756
    %v758 = vpop.xlane.xlu0 %757
    %v759 = vmul.f32 %v755, %v617
    %v760 = vmul.f32 %v758, %v617
    %v761 = vsub.f32 %v751, %v759
    %v762 = vsub.f32 %v752, %v760
    %v763 = vmul.f32 %v761, %v761
    %v764 = vmul.f32 %v762, %v762
    %v765 = vsel %vm93, %v763, 0.0
    %766 = vadd.xlane.f32.xlu0 %v765
    %v767 = vpop.xlane.xlu0 %766
    %v768 = vsel %vm93, %v764, 0.0
    %769 = vadd.xlane.f32.xlu0 %v768
    %v770 = vpop.xlane.xlu0 %769
    %v771 = vmul.f32 %v767, %v617
    %v772 = vmul.f32 %v770, %v617
    %v773 = vadd.f32 %v771, 1e-05
    %v774 = vadd.f32 %v772, 1e-05
    %v775 = vrsqrt.pop %v773
    %v776 = vmul.f32 %v775, %v773
    %v777 = vmul.f32 %v776, %v775
    %v778 = vmul.f32 0.5, %v777
    %v779 = vsub.f32 1.5, %v778
    %v780 = vmul.f32 %v775, %v779
    %vm781 = vweird.f32 %v773
    %vm782 = vweird.f32 %v775
    %vm783 = vmor %vm781, %vm782
    %v784 = vsel %vm783, %v775, %v780
    %v785 = vrsqrt.pop %v774
    %v786 = vmul.f32 %v785, %v774
    %v787 = vmul.f32 %v786, %v785
    %v788 = vmul.f32 0.5, %v787
    %v789 = vsub.f32 1.5, %v788
    %v790 = vmul.f32 %v785, %v789
    %vm791 = vweird.f32 %v774
    %vm792 = vweird.f32 %v785
    %vm793 = vmor %vm791, %vm792
    %v794 = vsel %vm793, %v785, %v790
    %v795 = vmul.f32 %v761, %v784
    %v796 = vmul.f32 %v762, %v794
    %797 = vrot.lane.b32.xlu0 %v656, 64
    %v798 = vpop.permute.xlu0 %797
    %v800 = vmul.f32 %v795, %v798
    %v801 = vmul.f32 %v796, %v798
    %802 = vrot.lane.b32.xlu0 %v656, 32
    %v803 = vpop.permute.xlu0 %802
    %v805 = vadd.f32 %v800, %v803
    %v806 = vadd.f32 %v801, %v803
    %807 = vst.msk [vmem:[#allocation10] sm:$0xff] %vm93, %v805
    %808 = vst.msk [vmem:[#allocation10 + $0x8] sm:$0xff] %vm93, %v806
    // Predicated region
    $region34: #{tpu_custom_call.1} parent=1 // pred_check
      _
    $region35: #{tpu_custom_call.1} parent=1 // pred_check_branch
      %810 = sbr.rel (0) target = $region37
    $region36: #{tpu_custom_call.1} parent=1 // pred_region
      %812 = vsyncadd [#allocation4], 0
      %s813 = sshll.u32 [#allocation10], 4
      %s814 = int_to_ptr.vmem [resolvable:$true] %s813
      %s815 = sshll.u32 %s4, 4
      %s816 = int_to_ptr.hbm [resolvable:$true] %s815
      %821 = dma.vmem_to_hbm [thread:$0]  %s814, 256, %s816, [#allocation4], 128, 128, 8
    $region37: #{tpu_custom_call.1} parent=1 // pred_fallthru
      _
    // Predicated region
    $region38: #{tpu_custom_call.1} parent=1 // pred_check
      _
    $region39: #{tpu_custom_call.1} parent=1 // pred_check_branch
      %823 = sbr.rel (0) target = $region41
    $region40: #{tpu_custom_call.1} parent=1 // pred_region
      %825 = dma.done [#allocation4], 256
    $region41: #{tpu_custom_call.1} parent=1 // pred_fallthru
      _
    %826 = vsyncpa [#allocation3], 1
    %827 = vsyncpa [#allocation6], 1
    %828 = vsyncpa [#allocation9], 1
    %829 = vsyncpa [#allocation4], 1

</llo_original>
